<compile_context>
chip_gen: v7x
topology: tpu7x:2x2x1
jax: 0.10.0
libtpu: 0.0.40
codegen_flags: <defaults>
</compile_context>

<pallas_src>
import math

import jax
import jax.numpy as jnp
from jax.experimental import pallas as pl
from jax.experimental.pallas import tpu as pltpu

BN_EPS = 1e-5
LANES = 128


def cal_hidden(seq_len):
    h1 = math.floor((seq_len - 10) / 5 + 1)
    h2 = math.floor((h1 - 3) / 2 + 1)
    h3 = math.floor((h2 - 3) / 2 + 1)
    h4 = math.floor((h3 - 3) / 2 + 1)
    h5 = math.floor((h4 - 3) / 2 + 1)
    h6 = math.floor((h5 - 2) / 2 + 1)
    h7 = math.floor((h6 - 2) / 2 + 1)
    return h7


def head_kernel(logits_ref, p_ref, out_ref):
    """Fused BN(train-mode batch stats) + fc1(T->1) + fc2(32->7, padded)."""
    x = logits_ref[...].astype(jnp.float32)          # (B, T, C), one upcast
    B, T, C = x.shape
    inv_n = 1.0 / (B * T)                             # compile-time constant

    # Packed parameter slab (rows):
    #   [0:C]        w2^T zero-padded to 128 lanes
    #   [C]          gamma
    #   [C+1]        beta*S + b1
    #   [C+2]        b2 zero-padded to 128 lanes
    #   [C+3]        S = sum_t w1[t], replicated across lanes (lane-dense)
    #   [C+4:C+4+T]  w1[t] replicated across lanes
    w2t = p_ref[0:C, :]                               # (C, 128), feeds MXU
    prow = p_ref[C:C + 4 + T, :]                      # (4+T, 128)
    gamma = prow[0:1, 0:C]                            # (1, C)
    beta_eff = prow[1:2, 0:C]                         # (1, C) = beta*S + b1
    b2 = prow[2:3, :]                                 # (1, 128)
    s_w1 = prow[3:4, 0:C]                             # (1, C) = S (lane-dense)
    w1 = prow[4:4 + T, 0:C]                           # (T, C)

    # Single traversal of x: moments for BN + w1-weighted time reduction.
    s1 = jnp.sum(x * w1[None, :, :], axis=1)          # (B, C)  sum_t x*w1
    mean = jnp.sum(x, axis=(0, 1), keepdims=True)[0] * inv_n        # (1, C)
    msq = jnp.sum(x * x, axis=(0, 1), keepdims=True)[0] * inv_n     # (1, C)
    var = msq - mean * mean                           # biased variance
    inv = jax.lax.rsqrt(var + BN_EPS)                 # (1, C)

    # Folded BN affine + fc1:  y = gamma*inv*(s1 - mean*S) + beta*S + b1
    y = gamma * inv * (s1 - mean * s_w1) + beta_eff   # (B, C)

    # fc2 on the MXU with a lane-dense (128-wide, zero-padded) class axis.
    out_ref[...] = jnp.dot(y, w2t, preferred_element_type=jnp.float32) + b2


def _pack_params(gamma, beta, w1, b1, w2, b2):
    """Pack all small params (incl. w1) into one (rows, 128) f32 slab."""
    C = gamma.shape[0]
    n_cls = w2.shape[0]
    w1_flat = jnp.asarray(w1, jnp.float32).reshape(-1)       # (T,)
    T = w1_flat.shape[0]
    S = jnp.sum(w1_flat)
    b1s = jnp.asarray(b1, jnp.float32).reshape(())

    def lane_row(vec):
        vec = jnp.asarray(vec, jnp.float32).reshape(-1)
        return jnp.zeros((LANES,), jnp.float32).at[: vec.shape[0]].set(vec)

    w2t_pad = jnp.zeros((C, LANES), jnp.float32).at[:, :n_cls].set(
        jnp.asarray(w2, jnp.float32).T)
    rows = jnp.stack(
        [lane_row(gamma),
         lane_row(jnp.asarray(beta, jnp.float32) * S + b1s),
         lane_row(b2),
         jnp.full((LANES,), S, jnp.float32)], axis=0)         # S lane-dense
    w1_rows = jnp.broadcast_to(w1_flat[:, None], (T, LANES))  # w1 lane-dense
    slab = jnp.concatenate([w2t_pad, rows, w1_rows], axis=0)
    pad = (-slab.shape[0]) % 8
    if pad:
        slab = jnp.concatenate(
            [slab, jnp.zeros((pad, LANES), jnp.float32)], axis=0)
    return slab


def wav2vec_head(logits, gamma, beta, w1, b1, w2, b2):
    """logits: (B, T, C) channels-last encoder output (bf16 or f32);
    returns (B, n_cls) f32."""
    B, T, C = logits.shape
    n_cls = w2.shape[0]
    slab = _pack_params(gamma, beta, w1, b1, w2, b2)

    vmem = pl.BlockSpec(memory_space=pltpu.MemorySpace.VMEM)
    cost = pl.CostEstimate(
        flops=4 * B * T * C + 2 * B * C * LANES,
        transcendentals=C,
        bytes_accessed=(logits.size * logits.dtype.itemsize
                        + slab.size * 4 + B * LANES * 4))
    out_padded = pl.pallas_call(
        head_kernel,
        out_shape=jax.ShapeDtypeStruct((B, LANES), jnp.float32),
        in_specs=[vmem, vmem],
        out_specs=vmem,
        cost_estimate=cost,
    )(logits, slab)
    return out_padded[:, :n_cls]


if __name__ == "__main__":
    B = 2
    small_seq_len = 8000                      # small stand-in for 64000
    T = cal_hidden(small_seq_len)             # -> 24 (hidden_size for fc1)
    C = 32                                    # wav2vec2 CTC vocab / BN channels
    n_cls = 7

    key = jax.random.PRNGKey(0)
    k_logits, k_w1, k_b1, k_w2, k_b2 = jax.random.split(key, 5)

    # Synthesized encoder logits (see TODO(synk) above); shipped in bf16.
    logits = jax.random.normal(
        k_logits, (B, T, C), dtype=jnp.float32).astype(jnp.bfloat16)

    # Deterministic parameter init (shapes from the nn.Module __init__).
    gamma = jnp.ones((C,), jnp.float32)       # BatchNorm1d weight init
    beta = jnp.zeros((C,), jnp.float32)       # BatchNorm1d bias init
    bound1 = 1.0 / math.sqrt(T)
    w1 = jax.random.uniform(k_w1, (1, T), jnp.float32, -bound1, bound1)
    b1 = jax.random.uniform(k_b1, (1,), jnp.float32, -bound1, bound1)
    bound2 = 1.0 / math.sqrt(C)
    w2 = jax.random.uniform(k_w2, (n_cls, C), jnp.float32, -bound2, bound2)
    b2 = jax.random.uniform(k_b2, (n_cls,), jnp.float32, -bound2, bound2)

    out = wav2vec_head(logits, gamma, beta, w1, b1, w2, b2)
    out = jax.block_until_ready(out)

    # Plain-JAX reference (mirrors the PyTorch forward exactly; same bf16
    # inputs, f32 math).
    xf = logits.astype(jnp.float32)
    xp = jnp.transpose(xf, (0, 2, 1))                         # (B, C, T)
    mean = jnp.mean(xp, axis=(0, 2), keepdims=True)
    var = jnp.mean((xp - mean) ** 2, axis=(0, 2), keepdims=True)
    xn = (xp - mean) / jnp.sqrt(var + BN_EPS) * gamma[None, :, None] \
        + beta[None, :, None]
    y = jnp.einsum("bct,t->bc", xn, w1[0]) + b1[0]            # fc1 + squeeze
    ref = y @ w2.T + b2[None, :]                              # fc2

    assert out.shape == (B, n_cls), out.shape
    assert jnp.allclose(out, ref, atol=1e-4, rtol=1e-4), (out, ref)
    print("KERNEL_OK")
</pallas_src>

<mosaic_0001>
module attributes {stable_mosaic.version = 11 : i64} {
  func.func @head_kernel(%arg0: memref<2x24x32xbf16, #tpu.memory_space<vmem>>, %arg1: memref<64x128xf32, #tpu.memory_space<vmem>>, %arg2: memref<2x128xf32, #tpu.memory_space<vmem>>) attributes {dimension_semantics = [], scalar_prefetch = 0 : i64, scratch_operands = 0 : i64, tpu.core_type = #tpu.core_type<tc>} {
    %c0 = arith.constant 0 : index
    %c0_0 = arith.constant 0 : index
    %c0_1 = arith.constant 0 : index
    %0 = vector.load %arg0[%c0, %c0_0, %c0_1] : memref<2x24x32xbf16, #tpu.memory_space<vmem>>, vector<2x24x32xbf16>
    %1 = arith.extf %0 : vector<2x24x32xbf16> to vector<2x24x32xf32>
    %c0_2 = arith.constant 0 : index
    %c0_3 = arith.constant 0 : index
    %2 = vector.load %arg1[%c0_2, %c0_3] : memref<64x128xf32, #tpu.memory_space<vmem>>, vector<32x128xf32>
    %c32 = arith.constant 32 : index
    %c0_4 = arith.constant 0 : index
    %3 = vector.load %arg1[%c32, %c0_4] : memref<64x128xf32, #tpu.memory_space<vmem>>, vector<28x128xf32>
    %4 = vector.extract_strided_slice %3 {offsets = [0, 0], sizes = [1, 32], strides = [1, 1]} : vector<28x128xf32> to vector<1x32xf32>
    %5 = vector.extract_strided_slice %3 {offsets = [1, 0], sizes = [1, 32], strides = [1, 1]} : vector<28x128xf32> to vector<1x32xf32>
    %6 = vector.extract_strided_slice %3 {offsets = [2, 0], sizes = [1, 128], strides = [1, 1]} : vector<28x128xf32> to vector<1x128xf32>
    %7 = vector.extract_strided_slice %3 {offsets = [3, 0], sizes = [1, 32], strides = [1, 1]} : vector<28x128xf32> to vector<1x32xf32>
    %8 = vector.extract_strided_slice %3 {offsets = [4, 0], sizes = [24, 32], strides = [1, 1]} : vector<28x128xf32> to vector<24x32xf32>
    %9 = vector.shape_cast %8 : vector<24x32xf32> to vector<1x24x32xf32>
    %10 = vector.broadcast %9 : vector<1x24x32xf32> to vector<2x24x32xf32>
    %11 = arith.mulf %1, %10 : vector<2x24x32xf32>
    %cst = arith.constant dense<0.000000e+00> : vector<2x32xf32>
    %12 = vector.multi_reduction <add>, %11, %cst [1] : vector<2x24x32xf32> to vector<2x32xf32>
    %cst_5 = arith.constant dense<0.000000e+00> : vector<32xf32>
    %13 = vector.multi_reduction <add>, %1, %cst_5 [0, 1] : vector<2x24x32xf32> to vector<32xf32>
    %14 = vector.shape_cast %13 : vector<32xf32> to vector<1x1x32xf32>
    %15 = vector.shape_cast %14 : vector<1x1x32xf32> to vector<1x32xf32>
    %cst_6 = arith.constant 0.020833334 : f32
    %16 = vector.broadcast %cst_6 : f32 to vector<1x32xf32>
    %17 = arith.mulf %15, %16 : vector<1x32xf32>
    %18 = arith.mulf %1, %1 : vector<2x24x32xf32>
    %cst_7 = arith.constant dense<0.000000e+00> : vector<32xf32>
    %19 = vector.multi_reduction <add>, %18, %cst_7 [0, 1] : vector<2x24x32xf32> to vector<32xf32>
    %20 = vector.shape_cast %19 : vector<32xf32> to vector<1x1x32xf32>
    %21 = vector.shape_cast %20 : vector<1x1x32xf32> to vector<1x32xf32>
    %cst_8 = arith.constant 0.020833334 : f32
    %22 = vector.broadcast %cst_8 : f32 to vector<1x32xf32>
    %23 = arith.mulf %21, %22 : vector<1x32xf32>
    %24 = arith.mulf %17, %17 : vector<1x32xf32>
    %25 = arith.subf %23, %24 : vector<1x32xf32>
    %cst_9 = arith.constant 9.99999974E-6 : f32
    %26 = vector.broadcast %cst_9 : f32 to vector<1x32xf32>
    %27 = arith.addf %25, %26 : vector<1x32xf32>
    %28 = math.rsqrt %27 : vector<1x32xf32>
    %29 = arith.mulf %4, %28 : vector<1x32xf32>
    %30 = arith.mulf %17, %7 : vector<1x32xf32>
    %31 = vector.broadcast %30 : vector<1x32xf32> to vector<2x32xf32>
    %32 = arith.subf %12, %31 : vector<2x32xf32>
    %33 = vector.broadcast %29 : vector<1x32xf32> to vector<2x32xf32>
    %34 = arith.mulf %33, %32 : vector<2x32xf32>
    %35 = vector.broadcast %5 : vector<1x32xf32> to vector<2x32xf32>
    %36 = arith.addf %34, %35 : vector<2x32xf32>
    %cst_10 = arith.constant dense<0.000000e+00> : vector<2x128xf32>
    %37 = tpu.matmul %36, %2, %cst_10 {dimension_numbers = #tpu.dot_dimension_numbers<[1], [0], [0], [1], [0, 0, 1, 1], [], []>} : vector<2x32xf32>, vector<32x128xf32>, vector<2x128xf32> -> vector<2x128xf32>
    %38 = vector.broadcast %6 : vector<1x128xf32> to vector<2x128xf32>
    %39 = arith.addf %37, %38 : vector<2x128xf32>
    %c0_11 = arith.constant 0 : index
    %c0_12 = arith.constant 0 : index
    %40 = vector.load %arg2[%c0_11, %c0_12] : memref<2x128xf32, #tpu.memory_space<vmem>>, vector<2x128xf32>
    tpu.vector_store %arg2[%c0_11, %c0_12], %39 {strides = array<i32>} : memref<2x128xf32, #tpu.memory_space<vmem>>, vector<2x128xf32>,
    return
  }
}

</mosaic_0001>

<llo_original>
// kernel: tpu_custom_call.1
$region0: #{tpu_custom_call.1}
  #allocation0 [shape = 'u32[]', space=smem, size = 0x4, offset = 0x4, fixed_abs, tag = 'smem constant byte address 0x4 - core index']
  #allocation1 [shape = 'u32[144,128]{1,0:T(1,128)}', space=vmem, size = 0x12000, scoped, tag = 'internal scratch']
  %s0 = inlined_call_operand.hbm [shape: bf16[2,24,32], index: 0, kind: input, shape index: {}]
  %s1 = inlined_call_operand.hbm [shape: f32[64,128], index: 1, kind: input, shape index: {}]
  %s2 = inlined_call_operand.hbm [shape: f32[2,128], index: 2, kind: output, shape index: {}]
  %s3 = sld [smem:[#allocation0]]
  $region26: #{tpu_custom_call.1} parent=0
    _
  %s5 = ssub.s32 1, %s3
  %s6 = scalar_select 0, %s5, %s3
  $region1: #{tpu_custom_call.1} parent=0
    #allocation2 [shape = 'u8[12288]{0}', space=vmem, size = 0x3000, scoped, tag = 'input window, operand 0, single buffered']
    #allocation3 [shape = 's32[1]{0}', space=sflag, size = 0x4, scoped, tag = 'scoped memory for tpu_custom_call.1']
    #allocation4 [shape = 's32[1]{0}', space=sflag, size = 0x4, scoped, tag = 'scoped memory for tpu_custom_call.1']
    #allocation5 [shape = 'u8[32768]{0}', space=vmem, size = 0x8000, scoped, tag = 'input window, operand 1, single buffered']
    #allocation6 [shape = 's32[1]{0}', space=sflag, size = 0x4, scoped, tag = 'scoped memory for tpu_custom_call.1']
    #allocation7 [shape = 'u8[1024]{0}', space=vmem, size = 0x400, scoped, tag = 'output window, operand 0, single buffered']
    %7 = vsyncpa [#allocation3], 0
    %8 = vsyncpa [#allocation6], 0
    %9 = vsyncpa [#allocation4], 0
    // Predicated region
    $region2: #{tpu_custom_call.1} parent=1 // pred_check
      _
    $region3: #{tpu_custom_call.1} parent=1 // pred_check_branch
      %11 = sbr.rel (0) target = $region5
    $region4: #{tpu_custom_call.1} parent=1 // pred_region
      %s13 = ssub.s32 384, 384
      %14 = vsyncadd [#allocation3], %s13
      %s15 = sshll.u32 [#allocation2], 4
      %s16 = int_to_ptr.vmem [resolvable:$true] %s15
      %21 = dma.hbm_to_vmem [thread:$0]  %s0, 384, %s16, [#allocation3], 64, 64, 4
    $region5: #{tpu_custom_call.1} parent=1 // pred_fallthru
      _
    // Predicated region
    $region6: #{tpu_custom_call.1} parent=1 // pred_check
      _
    $region7: #{tpu_custom_call.1} parent=1 // pred_check_branch
      %23 = sbr.rel (0) target = $region9
    $region8: #{tpu_custom_call.1} parent=1 // pred_region
      %s25 = ssub.s32 1024, 1024
      %26 = vsyncadd [#allocation6], %s25
      %s27 = sshll.u32 [#allocation5], 4
      %s28 = int_to_ptr.vmem [resolvable:$true] %s27
      %33 = dma.hbm_to_vmem [thread:$0]  %s1, 1024, %s28, [#allocation6], 128, 128, 8
    $region9: #{tpu_custom_call.1} parent=1 // pred_fallthru
      _
    // Predicated region
    $region10: #{tpu_custom_call.1} parent=1 // pred_check
      _
    $region11: #{tpu_custom_call.1} parent=1 // pred_check_branch
      %35 = sbr.rel (0) target = $region13
    $region12: #{tpu_custom_call.1} parent=1 // pred_region
      %36 = dma.done [#allocation3], 384
    $region13: #{tpu_custom_call.1} parent=1 // pred_fallthru
      _
    // Predicated region
    $region14: #{tpu_custom_call.1} parent=1 // pred_check
      _
    $region15: #{tpu_custom_call.1} parent=1 // pred_check_branch
      %38 = sbr.rel (0) target = $region17
    $region16: #{tpu_custom_call.1} parent=1 // pred_region
      %39 = dma.done [#allocation6], 1024
    $region17: #{tpu_custom_call.1} parent=1 // pred_fallthru
      _
    %v40 = vld [vmem:[#allocation2] sm:$0xf]
    %v41 = vld [vmem:[#allocation2 + $0x4] sm:$0xf]
    %v42 = vld [vmem:[#allocation2 + $0x8] sm:$0xf]
    %v43 = vld [vmem:[#allocation2 + $0xc] sm:$0xf]
    %v44 = vld [vmem:[#allocation2 + $0x10] sm:$0xf]
    %v45 = vld [vmem:[#allocation2 + $0x14] sm:$0xf]
    %v46 = vunpack.c.l.bf16 %v40
    %v47 = vunpack.c.l.bf16 %v41
    %v48 = vunpack.c.l.bf16 %v42
    %v49 = vunpack.c.l.bf16 %v43
    %v50 = vunpack.c.l.bf16 %v44
    %v51 = vunpack.c.l.bf16 %v45
    %v52 = vld [vmem:[#allocation5] sm:$0xff]
    %v53 = vld [vmem:[#allocation5 + $0x8] sm:$0xff]
    %v54 = vld [vmem:[#allocation5 + $0x10] sm:$0xff]
    %v55 = vld [vmem:[#allocation5 + $0x18] sm:$0xff]
    %v56 = vld [vmem:[#allocation5 + $0x20] sm:$0xff]
    %v57 = vld [vmem:[#allocation5 + $0x28] sm:$0xff]
    %v58 = vld [vmem:[#allocation5 + $0x30] sm:$0xff]
    %v59 = vld [vmem:[#allocation5 + $0x38] sm:$0xf]
    %vm64 = vcmask 1043456
    %v65 = vrot.slane %v56, 4
    %v66 = vrot.slane %v57, 4
    %v67 = vsel %vm64, %v65, %v66
    %v68 = vrot.slane %v58, 4
    %v69 = vsel %vm64, %v66, %v68
    %v70 = vrot.slane %v59, 4
    %v71 = vsel %vm64, %v68, %v70
    %v75 = vmul.f32 %v46, %v67
    %v76 = vmul.f32 %v47, %v69
    %v77 = vmul.f32 %v48, %v71
    %v78 = vmul.f32 %v49, %v67
    %v79 = vmul.f32 %v50, %v69
    %v80 = vmul.f32 %v51, %v71
    %vm81 = vcmask 261120
    %v82 = vsel %vm81, %v75, 0.0
    %v83 = vsel %vm81, %v76, 0.0
    %v84 = vadd.f32 %v82, %v83
    %v85 = vsel %vm81, %v77, 0.0
    %v86 = vadd.f32 %v84, %v85
    %v87 = vrot.slane %v86, 4
    %v88 = vadd.f32 %v86, %v87
    %v89 = vrot.slane %v88, 2
    %v90 = vadd.f32 %v88, %v89
    %v91 = vrot.slane %v90, 1
    %v92 = vadd.f32 %v90, %v91
    %v93 = vsel %vm81, %v78, 0.0
    %v94 = vsel %vm81, %v79, 0.0
    %v95 = vadd.f32 %v93, %v94
    %v96 = vsel %vm81, %v80, 0.0
    %v97 = vadd.f32 %v95, %v96
    %v98 = vrot.slane %v97, 4
    %v99 = vadd.f32 %v97, %v98
    %v100 = vrot.slane %v99, 2
    %v101 = vadd.f32 %v99, %v100
    %v102 = vrot.slane %v101, 1
    %v103 = vadd.f32 %v101, %v102
    %v104 = vsel %vm81, %v46, 0.0
    %v105 = vsel %vm81, %v47, 0.0
    %v106 = vadd.f32 %v104, %v105
    %v107 = vsel %vm81, %v48, 0.0
    %v108 = vadd.f32 %v106, %v107
    %v109 = vsel %vm81, %v49, 0.0
    %v110 = vadd.f32 %v108, %v109
    %v111 = vsel %vm81, %v50, 0.0
    %v112 = vadd.f32 %v110, %v111
    %v113 = vsel %vm81, %v51, 0.0
    %v114 = vadd.f32 %v112, %v113
    %v115 = vrot.slane %v114, 4
    %v116 = vadd.f32 %v114, %v115
    %v117 = vrot.slane %v116, 2
    %v118 = vadd.f32 %v116, %v117
    %v119 = vrot.slane %v118, 1
    %v120 = vadd.f32 %v118, %v119
    %v121 = vmul.f32 %v120, 0.020833334
    %v122 = vmul.f32 %v46, %v46
    %v123 = vmul.f32 %v47, %v47
    %v124 = vmul.f32 %v48, %v48
    %v125 = vmul.f32 %v49, %v49
    %v126 = vmul.f32 %v50, %v50
    %v127 = vmul.f32 %v51, %v51
    %v128 = vsel %vm81, %v122, 0.0
    %v129 = vsel %vm81, %v123, 0.0
    %v130 = vadd.f32 %v128, %v129
    %v131 = vsel %vm81, %v124, 0.0
    %v132 = vadd.f32 %v130, %v131
    %v133 = vsel %vm81, %v125, 0.0
    %v134 = vadd.f32 %v132, %v133
    %v135 = vsel %vm81, %v126, 0.0
    %v136 = vadd.f32 %v134, %v135
    %v137 = vsel %vm81, %v127, 0.0
    %v138 = vadd.f32 %v136, %v137
    %v139 = vrot.slane %v138, 4
    %v140 = vadd.f32 %v138, %v139
    %v141 = vrot.slane %v140, 2
    %v142 = vadd.f32 %v140, %v141
    %v143 = vrot.slane %v142, 1
    %v144 = vadd.f32 %v142, %v143
    %v145 = vmul.f32 %v144, 0.020833334
    %v146 = vmul.f32 %v121, %v121
    %v147 = vsub.f32 %v145, %v146
    %v148 = vadd.f32 %v147, 1e-05
    %v149 = vrsqrt.pop %v148
    %v150 = vmul.f32 %v56, %v149
    %v151 = vmul.f32 %v121, %v56
    %v152 = vlaneseq
    %v153 = vshrl.u32 %v152, 7
    %v154 = vsub.s32 3, %v153
    %v155 = vrot.slane %v151, %v154
    %v156 = vsub.f32 %v92, %v155
    %v157 = vsub.f32 %v103, %v155
    %v158 = vlaneseq
    %v159 = vshrl.u32 %v158, 7
    %v160 = vsub.s32 0, %v159
    %v161 = vrot.slane %v150, %v160
    %v164 = vrot.slane %v157, 7
    %vm165 = vcmask 1041409
    %v166 = vsel %vm165, %v164, %v156
    %v168 = vmul.f32 %v161, %v166
    %v169 = vlaneseq
    %v170 = vshrl.u32 %v169, 7
    %v171 = vsub.s32 1, %v170
    %v172 = vrot.slane %v56, %v171
    %v173 = vadd.f32 %v168, %v172
    %v174 = vlaneseq
    %v175 = vshrl.u32 %v174, 7
    %v176 = vsub.s32 2, %v175
    %v177 = vrot.slane %v56, %v176
    %v179 = vsel %vm81, %v173, 0
    %181 = vmatprep.subr.mxu0 0.0
    %182 = vmatpush1.msra.mxu0 %v52
    %183 = vmatprep.subr.mxu0 0.0
    %184 = vmatpush1.msra.mxu0 %v53
    %185 = vmatprep.subr.mxu0 0.0
    %186 = vmatpush1.msra.mxu0 %v54
    %187 = vmatprep.subr.mxu0 0.0
    %188 = vmatpush1.msra.mxu0 %v55
    %189 = vmatprep.subr.mxu0 0.0
    %190 = vmatpush1.msra.mxu0 0.0
    %191 = vmatprep.subr.mxu0 0.0
    %192 = vmatpush1.msra.mxu0 0.0
    %193 = vmatprep.subr.mxu0 0.0
    %194 = vmatpush1.msra.mxu0 0.0
    %195 = vmatprep.subr.mxu0 0.0
    %196 = vmatpush1.msra.mxu0 0.0
    %197 = vmatprep.subr.mxu0 0.0
    %198 = vmatpush1.msra.mxu0 0.0
    %199 = vmatprep.subr.mxu0 0.0
    %200 = vmatpush1.msra.mxu0 0.0
    %201 = vmatprep.subr.mxu0 0.0
    %202 = vmatpush1.msra.mxu0 0.0
    %203 = vmatprep.subr.mxu0 0.0
    %204 = vmatpush1.msra.mxu0 0.0
    %205 = vmatprep.subr.mxu0 0.0
    %206 = vmatpush1.msra.mxu0 0.0
    %207 = vmatprep.subr.mxu0 0.0
    %208 = vmatpush1.msra.mxu0 0.0
    %209 = vmatprep.subr.mxu0 0.0
    %210 = vmatpush1.msra.mxu0 0.0
    %211 = vmatprep.subr.mxu0 0.0
    %212 = vmatpush1.msra.mxu0 0.0
    %213 = vmatprep.subr.mxu0 0.0
    %214 = vmatpush1.msra.mxu0 0.0
    %215 = vmatprep.subr.mxu0 0.0
    %216 = vmatpush1.msra.mxu0 0.0
    %217 = vmatprep.subr.mxu0 0.0
    %218 = vmatpush1.msra.mxu0 0.0
    %219 = vmatprep.subr.mxu0 0.0
    %220 = vmatpush1.msra.mxu0 0.0
    %221 = vmatprep.subr.mxu0 0.0
    %222 = vmatpush1.msra.mxu0 0.0
    %223 = vmatprep.subr.mxu0 0.0
    %224 = vmatpush1.msra.mxu0 0.0
    %225 = vmatprep.subr.mxu0 0.0
    %226 = vmatpush1.msra.mxu0 0.0
    %227 = vmatprep.subr.mxu0 0.0
    %228 = vmatpush1.msra.mxu0 0.0
    %229 = vmatprep.subr.mxu0 0.0
    %230 = vmatpush1.msra.mxu0 0.0
    %231 = vmatprep.subr.mxu0 0.0
    %232 = vmatpush1.msra.mxu0 0.0
    %233 = vmatprep.subr.mxu0 0.0
    %234 = vmatpush1.msra.mxu0 0.0
    %235 = vmatprep.subr.mxu0 0.0
    %236 = vmatpush1.msra.mxu0 0.0
    %237 = vmatprep.subr.mxu0 0.0
    %238 = vmatpush1.msra.mxu0 0.0
    %239 = vmatprep.subr.mxu0 0.0
    %240 = vmatpush1.msra.mxu0 0.0
    %241 = vmatprep.subr.mxu0 0.0
    %242 = vmatpush1.msra.mxu0 0.0
    %243 = vmatprep.subr.mxu0 0.0
    %244 = vmatpush1.msra.mxu0 0.0
    %245 = vmatprep.mubr.f32.mxu0 0.0
    %246 = vmatmul.mubr.f32.gmra.mrb[0].mxu0 %v179
    %v247 = vpop.f32.mrb[0].mxu0
    %v248 = vadd.f32 %v177, %v247
    %v249 = vpop.f32.mrb[0].mxu0
    %250 = vdwg.mxu0
    %251 = vst [vmem:[#allocation7] sm:$0x3] %v248
    // Predicated region
    $region18: #{tpu_custom_call.1} parent=1 // pred_check
      _
    $region19: #{tpu_custom_call.1} parent=1 // pred_check_branch
      %253 = sbr.rel (0) target = $region21
    $region20: #{tpu_custom_call.1} parent=1 // pred_region
      %s255 = ssub.s32 32, 32
      %256 = vsyncadd [#allocation4], %s255
      %s258 = sshll.u32 [#allocation7], 4
      %s259 = int_to_ptr.vmem [resolvable:$true] %s258
      %261 = dma.vmem_to_hbm [thread:$0]  %s259, 32, %s2, [#allocation4]
    $region21: #{tpu_custom_call.1} parent=1 // pred_fallthru
      _
    // Predicated region
    $region22: #{tpu_custom_call.1} parent=1 // pred_check
      _
    $region23: #{tpu_custom_call.1} parent=1 // pred_check_branch
      %263 = sbr.rel (0) target = $region25
    $region24: #{tpu_custom_call.1} parent=1 // pred_region
      %264 = dma.done [#allocation4], 32
    $region25: #{tpu_custom_call.1} parent=1 // pred_fallthru
      _
    %265 = vsyncpa [#allocation3], 1
    %266 = vsyncpa [#allocation6], 1
    %267 = vsyncpa [#allocation4], 1

</llo_original>
